<compile_context>
chip_gen: v6e
topology: v6e:2x2x1
jax: 0.10.0
libtpu: 0.0.40
codegen_flags: <defaults>
</compile_context>

<pallas_src>
import functools

import jax
import jax.numpy as jnp
from jax.experimental import pallas as pl
from jax.experimental.pallas import tpu as pltpu


def _energy_kernel(x_ref, w_ref, b_ref, t_ref, out_ref, *,
                   prediction_lr, iterations, block_rows, n_valid, padded):
    # x_ref: (TM, D) native-dtype VMEM tile of the flattened inputs
    # w_ref: (1, D)  native-dtype VMEM (resident across the grid)
    # b_ref: (1,)    f32 SMEM scalar bias
    # t_ref: (1, TM) native-dtype VMEM tile of the lane-dense targets
    # out_ref: (1, 3) f32 SMEM -> per-block partial [loss, sum_p_e, sum_g_e]
    i = pl.program_id(0)

    x = x_ref[...]
    w = w_ref[...]
    t = t_ref[...].astype(jnp.float32)
    bias = b_ref[0]

    # Lane-dense salience: contract D of both operands -> (1, TM) out of the MXU.
    s = jax.lax.dot_general(
        w, x, dimension_numbers=(((1,), (1,)), ((), ())),
        preferred_element_type=jnp.float32)
    s = jnp.maximum(s + bias, 0.0)                        # relu(Linear(x)), (1, TM)

    # fit_predicted_labels: one effective SGD step on the 0.5-initialised labels
    # (extra iterations are value-preserving no-ops, see header comment).
    if iterations >= 1:
        labels = jnp.clip(0.5 - prediction_lr * s, 0.0, 1.0)
    else:
        labels = jnp.full_like(s, 0.5)

    # round_predicted_labels (torch.round == round-half-to-even == jnp.round)
    p_labels = jnp.round(labels)

    # compute_energy / compute_loss (all lane-dense (1, TM))
    p_energy = p_labels * s
    g_energy = t * s
    loss_elems = jnp.maximum((p_labels - t) ** 2 + g_energy - p_energy, 0.0)

    if padded:
        # Zero contribution of rows past the true B*N extent (wrapper padding).
        idx = jax.lax.broadcasted_iota(jnp.int32, s.shape, 1) + i * block_rows
        valid = idx < n_valid
        zero = jnp.zeros_like(s)
        loss_elems = jnp.where(valid, loss_elems, zero)
        p_energy = jnp.where(valid, p_energy, zero)
        g_energy = jnp.where(valid, g_energy, zero)

    # Fused per-tile reduction epilogue -> three scalars in SMEM.
    out_ref[0, 0] = jnp.sum(loss_elems)
    out_ref[0, 1] = jnp.sum(p_energy)
    out_ref[0, 2] = jnp.sum(g_energy)


def energy_summarizer_forward(inputs, targets, weight, bias, *,
                              prediction_learning_rate, iterations,
                              block_rows=None):
    """inputs: (B, N, D), targets: (B, N), weight: (1, D), bias: (1,)."""
    B, N, D = inputs.shape
    R = B * N
    in_dtype = inputs.dtype
    itemsize = jnp.dtype(in_dtype).itemsize

    # Keep native dtype (no f32 upcast in the wrapper); lane-dense targets row.
    x = inputs.reshape(R, D)
    t = targets.reshape(1, R)
    w = weight.reshape(1, D).astype(in_dtype)
    b = bias.reshape(1).astype(jnp.float32)

    # Row-block size: multiple of 128 (lane-dense layout), sized so the
    # double-buffered x tiles stay well inside scoped VMEM on all generations
    # (including v7x's 64 MiB physical / 32 MiB default scoped VMEM).
    lane_d = max(-(-D // 128) * 128, 128)            # lane padding of D
    if block_rows is None:
        per_buf_budget = 8 * 1024 * 1024             # bytes per pipelined x buffer
        tm = per_buf_budget // (lane_d * itemsize)
        tm = max(128, min(2048, (tm // 128) * 128))
    else:
        tm = int(block_rows)
    tm = min(tm, -(-R // 128) * 128)                 # don't over-pad tiny inputs

    r_pad = -(-R // tm) * tm
    padded = r_pad != R
    if padded:
        x = jnp.pad(x, ((0, r_pad - R), (0, 0)))
        t = jnp.pad(t, ((0, 0), (0, r_pad - R)))
    num_blocks = r_pad // tm

    kernel = functools.partial(
        _energy_kernel,
        prediction_lr=float(prediction_learning_rate),
        iterations=int(iterations),
        block_rows=tm,
        n_valid=R,
        padded=padded)

    t_item = jnp.dtype(targets.dtype).itemsize
    cost = pl.CostEstimate(
        flops=2 * r_pad * D,
        transcendentals=0,
        bytes_accessed=(r_pad * D * itemsize + r_pad * t_item
                        + D * itemsize + 4 + num_blocks * 3 * 4))

    partials = pl.pallas_call(
        kernel,
        out_shape=jax.ShapeDtypeStruct((num_blocks, 3), jnp.float32),
        grid=(num_blocks,),
        in_specs=[
            pl.BlockSpec((tm, D), lambda i: (i, 0)),                    # x tile
            pl.BlockSpec((1, D), lambda i: (0, 0)),                     # weight
            pl.BlockSpec((1,), lambda i: (0,),
                         memory_space=pltpu.MemorySpace.SMEM),          # bias
            pl.BlockSpec((1, tm), lambda i: (0, i)),                    # targets
        ],
        out_specs=pl.BlockSpec((1, 3), lambda i: (i, 0),
                               memory_space=pltpu.MemorySpace.SMEM),
        compiler_params=pltpu.CompilerParams(
            dimension_semantics=("parallel",),        # v7x: both TCs split rows
            vmem_limit_bytes=32 * 1024 * 1024),
        cost_estimate=cost,
    )(x, w, b, t)

    totals = jnp.sum(partials, axis=0)
    return totals[0], totals[1], totals[2]


def _reference_forward(inputs, targets, weight, bias, *,
                       prediction_learning_rate, iterations):
    """Pure-JAX reference mirroring the PyTorch module, for correctness check."""
    s = jnp.maximum(jnp.einsum("bnd,d->bn", inputs.astype(jnp.float32),
                               weight[0].astype(jnp.float32)) + bias[0], 0.0)
    if iterations >= 1:
        labels = jnp.clip(0.5 - prediction_learning_rate * s, 0.0, 1.0)
    else:
        labels = jnp.full_like(s, 0.5)
    p_labels = jnp.round(labels)
    tgt = targets.astype(jnp.float32)
    p_energy = p_labels * s
    g_energy = tgt * s
    loss = jnp.sum(jnp.maximum((p_labels - tgt) ** 2 + g_energy - p_energy, 0.0))
    return loss, jnp.sum(p_energy), jnp.sum(g_energy)


if __name__ == "__main__":
    # Hyper-parameters (the "kwargs" object of the PyTorch module)
    batch_size = 2
    n_sentences = 8
    input_size = 32
    prediction_learning_rate = 0.1
    iterations = 5

    key = jax.random.PRNGKey(0)
    k_in, k_tg, k_w, k_b = jax.random.split(key, 4)

    inputs = jax.random.normal(k_in, (batch_size, n_sentences, input_size),
                               dtype=jnp.float32)
    # gold labels in {0, 1}
    targets = jax.random.bernoulli(k_tg, 0.5,
                                   (batch_size, n_sentences)).astype(jnp.float32)

    # Deterministic init of nn.Linear(input_size, 1): U(-1/sqrt(D), 1/sqrt(D))
    bound = 1.0 / (input_size ** 0.5)
    weight = jax.random.uniform(k_w, (1, input_size), dtype=jnp.float32,
                                minval=-bound, maxval=bound)
    bias = jax.random.uniform(k_b, (1,), dtype=jnp.float32,
                              minval=-bound, maxval=bound)

    loss, p_e, g_e = energy_summarizer_forward(
        inputs, targets, weight, bias,
        prediction_learning_rate=prediction_learning_rate,
        iterations=iterations)
    jax.block_until_ready((loss, p_e, g_e))

    ref = _reference_forward(
        inputs, targets, weight, bias,
        prediction_learning_rate=prediction_learning_rate,
        iterations=iterations)

    for got, want in zip((loss, p_e, g_e), ref):
        assert jnp.allclose(got, want, rtol=1e-4, atol=1e-4), (got, want)

    print("KERNEL_OK")
</pallas_src>

<mosaic_0001>
module attributes {stable_mosaic.version = 11 : i64} {
  func.func @_energy_kernel(%arg0: i32, %arg1: memref<128x32xf32, #tpu.memory_space<vmem>>, %arg2: memref<1x32xf32, #tpu.memory_space<vmem>>, %arg3: memref<1xf32, #tpu.memory_space<smem>>, %arg4: memref<1x128xf32, #tpu.memory_space<vmem>>, %arg5: memref<1x3xf32, #tpu.memory_space<smem>>) attributes {dimension_semantics = [#tpu.dimension_semantics<parallel>], iteration_bounds = array<i64: 1>, scalar_prefetch = 0 : i64, scratch_operands = 0 : i64, tpu.core_type = #tpu.core_type<tc>, window_params = [{transform_indices = @transform_0, window_bounds = array<i64: 128, 32>}, {pipeline_mode = #tpu.pipeline_mode<synchronous>, transform_indices = @transform_1, window_bounds = array<i64: 1, 32>}, {transform_indices = @transform_2, window_bounds = array<i64: 1>}, {transform_indices = @transform_3, window_bounds = array<i64: 1, 128>}, {transform_indices = @transform_4, window_bounds = array<i64: 1, 3>}]} {
    %c0 = arith.constant 0 : index
    %c0_0 = arith.constant 0 : index
    %0 = vector.load %arg1[%c0, %c0_0] : memref<128x32xf32, #tpu.memory_space<vmem>>, vector<128x32xf32>
    %c0_1 = arith.constant 0 : index
    %c0_2 = arith.constant 0 : index
    %1 = vector.load %arg2[%c0_1, %c0_2] : memref<1x32xf32, #tpu.memory_space<vmem>>, vector<1x32xf32>
    %c0_3 = arith.constant 0 : index
    %c0_4 = arith.constant 0 : index
    %2 = vector.load %arg4[%c0_3, %c0_4] : memref<1x128xf32, #tpu.memory_space<vmem>>, vector<1x128xf32>
    %c0_5 = arith.constant 0 : index
    %3 = memref.load %arg3[%c0_5] : memref<1xf32, #tpu.memory_space<smem>>
    %cst = arith.constant dense<0.000000e+00> : vector<1x128xf32>
    %4 = tpu.matmul %1, %0, %cst {dimension_numbers = #tpu.dot_dimension_numbers<[1], [1], [0], [0], [0, 0, 1, 0], [], []>} : vector<1x32xf32>, vector<128x32xf32>, vector<1x128xf32> -> vector<1x128xf32>
    %5 = vector.broadcast %3 : f32 to vector<1x128xf32>
    %6 = arith.addf %4, %5 : vector<1x128xf32>
    %cst_6 = arith.constant 0.000000e+00 : f32
    %7 = vector.broadcast %cst_6 : f32 to vector<1x128xf32>
    %8 = arith.maximumf %6, %7 : vector<1x128xf32>
    %cst_7 = arith.constant 1.000000e-01 : f32
    %9 = vector.broadcast %cst_7 : f32 to vector<1x128xf32>
    %10 = arith.mulf %9, %8 : vector<1x128xf32>
    %cst_8 = arith.constant 5.000000e-01 : f32
    %11 = vector.broadcast %cst_8 : f32 to vector<1x128xf32>
    %12 = arith.subf %11, %10 : vector<1x128xf32>
    %cst_9 = arith.constant 0.000000e+00 : f32
    %cst_10 = arith.constant 1.000000e+00 : f32
    %13 = vector.broadcast %cst_9 : f32 to vector<1x128xf32>
    %14 = arith.maximumf %13, %12 : vector<1x128xf32>
    %15 = vector.broadcast %cst_10 : f32 to vector<1x128xf32>
    %16 = arith.minimumf %15, %14 : vector<1x128xf32>
    %17 = math.roundeven %16 : vector<1x128xf32>
    %18 = arith.mulf %17, %8 : vector<1x128xf32>
    %19 = arith.mulf %2, %8 : vector<1x128xf32>
    %20 = arith.subf %17, %2 : vector<1x128xf32>
    %21 = arith.mulf %20, %20 : vector<1x128xf32>
    %22 = arith.addf %21, %19 : vector<1x128xf32>
    %23 = arith.subf %22, %18 : vector<1x128xf32>
    %cst_11 = arith.constant 0.000000e+00 : f32
    %24 = vector.broadcast %cst_11 : f32 to vector<1x128xf32>
    %25 = arith.maximumf %23, %24 : vector<1x128xf32>
    %26 = tpu.iota {dimensions = array<i32: 1>} : vector<1x128xi32>
    %c128_i32 = arith.constant 128 : i32
    %27 = arith.muli %arg0, %c128_i32 : i32
    %28 = vector.broadcast %27 : i32 to vector<1x128xi32>
    %29 = arith.addi %26, %28 : vector<1x128xi32>
    %c16_i32 = arith.constant 16 : i32
    %30 = vector.broadcast %c16_i32 : i32 to vector<1x128xi32>
    %31 = arith.cmpi slt, %29, %30 : vector<1x128xi32>
    %cst_12 = arith.constant 0.000000e+00 : f32
    %32 = vector.broadcast %cst_12 : f32 to vector<1x128xf32>
    %33 = arith.select %31, %25, %32 : vector<1x128xi1>, vector<1x128xf32>
    %34 = arith.select %31, %18, %32 : vector<1x128xi1>, vector<1x128xf32>
    %35 = arith.select %31, %19, %32 : vector<1x128xi1>, vector<1x128xf32>
    %36 = vector.shape_cast %33 : vector<1x128xf32> to vector<1x1x128xf32>
    %cst_13 = arith.constant dense<0.000000e+00> : vector<1xf32>
    %37 = vector.multi_reduction <add>, %36, %cst_13 [1, 2] : vector<1x1x128xf32> to vector<1xf32>
    %38 = vector.shape_cast %37 : vector<1xf32> to vector<1x1x1xf32>
    %39 = vector.extract %38[0, 0, 0] : f32 from vector<1x1x1xf32>
    %c0_14 = arith.constant 0 : index
    %c0_15 = arith.constant 0 : index
    %40 = memref.load %arg5[%c0_14, %c0_15] : memref<1x3xf32, #tpu.memory_space<smem>>
    memref.store %39, %arg5[%c0_14, %c0_15] : memref<1x3xf32, #tpu.memory_space<smem>>
    %41 = vector.shape_cast %34 : vector<1x128xf32> to vector<1x1x128xf32>
    %cst_16 = arith.constant dense<0.000000e+00> : vector<1xf32>
    %42 = vector.multi_reduction <add>, %41, %cst_16 [1, 2] : vector<1x1x128xf32> to vector<1xf32>
    %43 = vector.shape_cast %42 : vector<1xf32> to vector<1x1x1xf32>
    %44 = vector.extract %43[0, 0, 0] : f32 from vector<1x1x1xf32>
    %c0_17 = arith.constant 0 : index
    %c1 = arith.constant 1 : index
    %45 = memref.load %arg5[%c0_17, %c1] : memref<1x3xf32, #tpu.memory_space<smem>>
    memref.store %44, %arg5[%c0_17, %c1] : memref<1x3xf32, #tpu.memory_space<smem>>
    %46 = vector.shape_cast %35 : vector<1x128xf32> to vector<1x1x128xf32>
    %cst_18 = arith.constant dense<0.000000e+00> : vector<1xf32>
    %47 = vector.multi_reduction <add>, %46, %cst_18 [1, 2] : vector<1x1x128xf32> to vector<1xf32>
    %48 = vector.shape_cast %47 : vector<1xf32> to vector<1x1x1xf32>
    %49 = vector.extract %48[0, 0, 0] : f32 from vector<1x1x1xf32>
    %c0_19 = arith.constant 0 : index
    %c2 = arith.constant 2 : index
    %50 = memref.load %arg5[%c0_19, %c2] : memref<1x3xf32, #tpu.memory_space<smem>>
    memref.store %49, %arg5[%c0_19, %c2] : memref<1x3xf32, #tpu.memory_space<smem>>
    return
  }
  func.func @transform_0(%arg0: i32) -> (i32, i32) {
    %c0_i32 = arith.constant 0 : i32
    %c0_i32_0 = arith.constant 0 : i32
    return %arg0, %c0_i32 : i32, i32
  }
  func.func @transform_1(%arg0: i32) -> (i32, i32) {
    %c0_i32 = arith.constant 0 : i32
    %c0_i32_0 = arith.constant 0 : i32
    %c0_i32_1 = arith.constant 0 : i32
    return %c0_i32, %c0_i32_0 : i32, i32
  }
  func.func @transform_2(%arg0: i32) -> i32 {
    %c0_i32 = arith.constant 0 : i32
    %c0_i32_0 = arith.constant 0 : i32
    return %c0_i32 : i32
  }
  func.func @transform_3(%arg0: i32) -> (i32, i32) {
    %c0_i32 = arith.constant 0 : i32
    %c0_i32_0 = arith.constant 0 : i32
    return %c0_i32, %arg0 : i32, i32
  }
  func.func @transform_4(%arg0: i32) -> (i32, i32) {
    %c0_i32 = arith.constant 0 : i32
    %c0_i32_0 = arith.constant 0 : i32
    return %arg0, %c0_i32 : i32, i32
  }
}

</mosaic_0001>

<llo_original>
// kernel: tpu_custom_call.1
$region0: #{tpu_custom_call.1}
  #allocation0 [shape = 'u32[]', space=smem, size = 0x4, offset = 0x4, fixed_abs, tag = 'smem constant byte address 0x4 - core index']
  #allocation1 [shape = 'u32[144,128]{1,0:T(1,128)}', space=vmem, size = 0x12000, scoped, tag = 'internal scratch']
  #allocation2 [shape = 'f32[1]{0:T(128)S(6)}', space=smem, size = 0x200, scoped, tag = 'scoped memory for tpu_custom_call.1']
  %s0 = inlined_call_operand.vmem [shape: f32[128,32], index: 0, kind: input, shape index: {}]
  %s1 = inlined_call_operand.vmem [shape: f32[1,32], index: 1, kind: input, shape index: {}]
  %s2 = inlined_call_operand.<no memory space> [shape: f32[1], index: 2, kind: input, shape index: {}]
  %s3 = inlined_call_operand.vmem [shape: f32[1,128], index: 3, kind: input, shape index: {}]
  %s4 = inlined_call_operand.hbm [shape: f32[1,3], index: 4, kind: output, shape index: {}]
  %s5 = sld [smem:[#allocation0]]
  $region26: #{tpu_custom_call.1} parent=0
    _
  %s7 = ssub.s32 1, %s5
  %s8 = scalar_select 0, %s7, %s5
  %9 = sst [smem:[#allocation2]] %s2
  $region1: #{tpu_custom_call.1} parent=0
    #allocation3 [shape = 'u8[512]{0}', space=smem, size = 0x200, scoped, tag = 'output window, operand 0, single buffered']
    #allocation4 [shape = 's32[1]{0}', space=sflag, size = 0x4, scoped, tag = 'scoped memory for tpu_custom_call.1']
    %10 = vsyncpa [#allocation4], 0
    // Predicated region
    $region2: #{tpu_custom_call.1} parent=1 // pred_check
      _
    $region3: #{tpu_custom_call.1} parent=1 // pred_check_branch
      %12 = sbr.rel (0) target = $region5
    $region4: #{tpu_custom_call.1} parent=1 // pred_region
      _
    $region5: #{tpu_custom_call.1} parent=1 // pred_fallthru
      _
    // Predicated region
    $region6: #{tpu_custom_call.1} parent=1 // pred_check
      _
    $region7: #{tpu_custom_call.1} parent=1 // pred_check_branch
      %14 = sbr.rel (0) target = $region9
    $region8: #{tpu_custom_call.1} parent=1 // pred_region
      _
    $region9: #{tpu_custom_call.1} parent=1 // pred_fallthru
      _
    // Predicated region
    $region10: #{tpu_custom_call.1} parent=1 // pred_check
      _
    $region11: #{tpu_custom_call.1} parent=1 // pred_check_branch
      %16 = sbr.rel (0) target = $region13
    $region12: #{tpu_custom_call.1} parent=1 // pred_region
      _
    $region13: #{tpu_custom_call.1} parent=1 // pred_fallthru
      _
    // Predicated region
    $region14: #{tpu_custom_call.1} parent=1 // pred_check
      _
    $region15: #{tpu_custom_call.1} parent=1 // pred_check_branch
      %18 = sbr.rel (0) target = $region17
    $region16: #{tpu_custom_call.1} parent=1 // pred_region
      _
    $region17: #{tpu_custom_call.1} parent=1 // pred_fallthru
      _
    %v19 = vld [vmem:[%s0] sm:$0xff]
    %v20 = vld [vmem:[%s0 + $0x8] sm:$0xff]
    %v21 = vld [vmem:[%s0 + $0x10] sm:$0xff]
    %v22 = vld [vmem:[%s0 + $0x18] sm:$0xff]
    %v23 = vld [vmem:[%s0 + $0x20] sm:$0xff]
    %v24 = vld [vmem:[%s0 + $0x28] sm:$0xff]
    %v25 = vld [vmem:[%s0 + $0x30] sm:$0xff]
    %v26 = vld [vmem:[%s0 + $0x38] sm:$0xff]
    %v27 = vld [vmem:[%s0 + $0x40] sm:$0xff]
    %v28 = vld [vmem:[%s0 + $0x48] sm:$0xff]
    %v29 = vld [vmem:[%s0 + $0x50] sm:$0xff]
    %v30 = vld [vmem:[%s0 + $0x58] sm:$0xff]
    %v31 = vld [vmem:[%s0 + $0x60] sm:$0xff]
    %v32 = vld [vmem:[%s0 + $0x68] sm:$0xff]
    %v33 = vld [vmem:[%s0 + $0x70] sm:$0xff]
    %v34 = vld [vmem:[%s0 + $0x78] sm:$0xff]
    %v35 = vld [vmem:[%s1] sm:$0x1]
    %v36 = vld [vmem:[%s3] sm:$0x1]
    %s37 = sld [smem:[#allocation2]]
    %v38 = vstv %s37
    %vm39 = vcmask 261120
    %v41 = vsel %vm39, %v35, 0
    %v44 = vsel %vm39, %v19, 0
    %v47 = vsel %vm39, %v20, 0
    %v50 = vsel %vm39, %v21, 0
    %v53 = vsel %vm39, %v22, 0
    %v56 = vsel %vm39, %v23, 0
    %v59 = vsel %vm39, %v24, 0
    %v62 = vsel %vm39, %v25, 0
    %v65 = vsel %vm39, %v26, 0
    %v68 = vsel %vm39, %v27, 0
    %v71 = vsel %vm39, %v28, 0
    %v74 = vsel %vm39, %v29, 0
    %v77 = vsel %vm39, %v30, 0
    %v80 = vsel %vm39, %v31, 0
    %v83 = vsel %vm39, %v32, 0
    %v86 = vsel %vm39, %v33, 0
    %v89 = vsel %vm39, %v34, 0
    %91 = vmatprep.subr.mxu0 0.0
    %92 = vmatpush1.xpose.msra.mxu0 %v89
    %93 = vmatprep.subr.mxu0 0.0
    %94 = vmatpush1.xpose.msra.mxu0 %v86
    %95 = vmatprep.subr.mxu0 0.0
    %96 = vmatpush1.xpose.msra.mxu0 %v83
    %97 = vmatprep.subr.mxu0 0.0
    %98 = vmatpush1.xpose.msra.mxu0 %v80
    %99 = vmatprep.subr.mxu0 0.0
    %100 = vmatpush1.xpose.msra.mxu0 %v77
    %101 = vmatprep.subr.mxu0 0.0
    %102 = vmatpush1.xpose.msra.mxu0 %v74
    %103 = vmatprep.subr.mxu0 0.0
    %104 = vmatpush1.xpose.msra.mxu0 %v71
    %105 = vmatprep.subr.mxu0 0.0
    %106 = vmatpush1.xpose.msra.mxu0 %v68
    %107 = vmatprep.subr.mxu0 0.0
    %108 = vmatpush1.xpose.msra.mxu0 %v65
    %109 = vmatprep.subr.mxu0 0.0
    %110 = vmatpush1.xpose.msra.mxu0 %v62
    %111 = vmatprep.subr.mxu0 0.0
    %112 = vmatpush1.xpose.msra.mxu0 %v59
    %113 = vmatprep.subr.mxu0 0.0
    %114 = vmatpush1.xpose.msra.mxu0 %v56
    %115 = vmatprep.subr.mxu0 0.0
    %116 = vmatpush1.xpose.msra.mxu0 %v53
    %117 = vmatprep.subr.mxu0 0.0
    %118 = vmatpush1.xpose.msra.mxu0 %v50
    %119 = vmatprep.subr.mxu0 0.0
    %120 = vmatpush1.xpose.msra.mxu0 %v47
    %121 = vmatprep.subr.mxu0 0.0
    %122 = vmatpush1.xpose.msra.mxu0 %v44
    %123 = vmatprep.subr.mxu0 0.0
    %124 = vmatpush2.xpose.msra.mxu0 0.0
    %125 = vmatprep.subr.mxu0 0.0
    %126 = vmatpush2.xpose.msra.mxu0 0.0
    %127 = vmatprep.subr.mxu0 0.0
    %128 = vmatpush2.xpose.msra.mxu0 0.0
    %129 = vmatprep.subr.mxu0 0.0
    %130 = vmatpush2.xpose.msra.mxu0 0.0
    %131 = vmatprep.subr.mxu0 0.0
    %132 = vmatpush2.xpose.msra.mxu0 0.0
    %133 = vmatprep.subr.mxu0 0.0
    %134 = vmatpush2.xpose.msra.mxu0 0.0
    %135 = vmatprep.subr.mxu0 0.0
    %136 = vmatpush2.xpose.msra.mxu0 0.0
    %137 = vmatprep.subr.mxu0 0.0
    %138 = vmatpush2.xpose.msra.mxu0 0.0
    %139 = vmatprep.subr.mxu0 0.0
    %140 = vmatpush2.xpose.msra.mxu0 0.0
    %141 = vmatprep.subr.mxu0 0.0
    %142 = vmatpush2.xpose.msra.mxu0 0.0
    %143 = vmatprep.subr.mxu0 0.0
    %144 = vmatpush2.xpose.msra.mxu0 0.0
    %145 = vmatprep.subr.mxu0 0.0
    %146 = vmatpush2.xpose.msra.mxu0 0.0
    %147 = vmatprep.subr.mxu0 0.0
    %148 = vmatpush2.xpose.msra.mxu0 0.0
    %149 = vmatprep.subr.mxu0 0.0
    %150 = vmatpush2.xpose.msra.mxu0 0.0
    %151 = vmatprep.subr.mxu0 0.0
    %152 = vmatpush2.xpose.msra.mxu0 0.0
    %153 = vmatprep.subr.mxu0 0.0
    %154 = vmatpush2.xpose.msra.mxu0 0.0
    %155 = vmatprep.mubr.f32.mxu0 0.0
    %156 = vmatmul.mubr.f32.gmra.mxu0 %v41
    %v157 = vpop.f32.mrf.mxu0
    %v158 = vadd.f32 %v38, %v157
    %v159 = vpop.f32.mrf.mxu0
    %160 = vdwg.mxu0
    %v161 = vmax.f32 %v158, 0.0
    %v162 = vmul.f32 %v161, 0.1
    %v163 = vsub.f32 0.5, %v162
    %v164 = vmax.f32 %v163, 0.0
    %v165 = vmin.f32 %v164, 1.0
    %v166 = vround.ne.pseudo %v165
    %v167 = vmul.f32 %v166, %v161
    %v168 = vmul.f32 %v36, %v161
    %v169 = vsub.f32 %v166, %v36
    %v170 = vmul.f32 %v169, %v169
    %v171 = vadd.f32 %v170, %v168
    %v172 = vsub.f32 %v171, %v167
    %v173 = vmax.f32 %v172, 0.0
    %v174 = vlaneseq
    %v175 = vand.u32 %v174, 127
    %s176 = smul.u32 0, 128
    %v177 = vstv %s176
    %v178 = vadd.s32 %v175, %v177
    %vm179 = vcmp.lt.s32.totalorder %v178, 16
    %v180 = vsel %vm179, %v173, 0.0
    %v181 = vsel %vm179, %v167, 0.0
    %v182 = vsel %vm179, %v168, 0.0
    %vm183 = vcmask 1040384
    %v184 = vsel %vm183, %v180, 0.0
    %185 = vadd.xlane.f32.xlu0 %v184
    %v186 = vpop.xlane.xlu0 %185
    %v187 = vrot.slane %v186, 4
    %v188 = vadd.f32 %v186, %v187
    %v189 = vrot.slane %v188, 2
    %v190 = vadd.f32 %v188, %v189
    %v191 = vrot.slane %v190, 1
    %v192 = vadd.f32 %v190, %v191
    %s193 = vtos %v192
    %s194 = scalar_lea.smem [#allocation3], 0
    %195 = sst [smem:[%s194]] %s193
    %v196 = vsel %vm183, %v181, 0.0
    %197 = vadd.xlane.f32.xlu0 %v196
    %v198 = vpop.xlane.xlu0 %197
    %v199 = vrot.slane %v198, 4
    %v200 = vadd.f32 %v198, %v199
    %v201 = vrot.slane %v200, 2
    %v202 = vadd.f32 %v200, %v201
    %v203 = vrot.slane %v202, 1
    %v204 = vadd.f32 %v202, %v203
    %s205 = vtos %v204
    %s206 = scalar_lea.smem [#allocation3], 1
    %207 = sst [smem:[%s206]] %s205
    %v208 = vsel %vm183, %v182, 0.0
    %209 = vadd.xlane.f32.xlu0 %v208
    %v210 = vpop.xlane.xlu0 %209
    %v211 = vrot.slane %v210, 4
    %v212 = vadd.f32 %v210, %v211
    %v213 = vrot.slane %v212, 2
    %v214 = vadd.f32 %v212, %v213
    %v215 = vrot.slane %v214, 1
    %v216 = vadd.f32 %v214, %v215
    %s217 = vtos %v216
    %s218 = scalar_lea.smem [#allocation3], 2
    %219 = sst [smem:[%s218]] %s217
    // Predicated region
    $region18: #{tpu_custom_call.1} parent=1 // pred_check
      _
    $region19: #{tpu_custom_call.1} parent=1 // pred_check_branch
      %221 = sbr.rel (0) target = $region21
    $region20: #{tpu_custom_call.1} parent=1 // pred_region
      %s223 = ssub.s32 16, 16
      %224 = vsyncadd [#allocation4], %s223
      %227 = dma.smem_to_hbm [#allocation3], 16, %s4, [#allocation4]
    $region21: #{tpu_custom_call.1} parent=1 // pred_fallthru
      _
    // Predicated region
    $region22: #{tpu_custom_call.1} parent=1 // pred_check
      _
    $region23: #{tpu_custom_call.1} parent=1 // pred_check_branch
      %229 = sbr.rel (0) target = $region25
    $region24: #{tpu_custom_call.1} parent=1 // pred_region
      %230 = dma.done [#allocation4], 16
    $region25: #{tpu_custom_call.1} parent=1 // pred_fallthru
      _
    %231 = sfence
    %232 = vsyncpa [#allocation4], 1

</llo_original>
